<compile_context>
chip_gen: v7x
topology: tpu7x:2x2x1
jax: 0.10.0
libtpu: 0.0.40
codegen_flags: <defaults>
</compile_context>

<pallas_src>
import jax
import jax.numpy as jnp
from jax.experimental import pallas as pl
from jax.experimental.pallas import tpu as pltpu


def _round_up(x, m):
    return ((x + m - 1) // m) * m


def _tile_rows(M, block_m):
    """Row-tile size: multiple of 16 (bf16 sublane packing); >=2 grid steps
    whenever M is large enough to split (keeps both v7x TCs busy)."""
    if M < 16:
        return M                                   # full extent: always legal
    return min(block_m, _round_up(pl.cdiv(M, 2), 16))


# ---------------------------------------------------------------------------
# Fused kernel:  out = relu(xh @ W1h + xe @ W1e + b1) @ W2 + b2
#   xh : (TM, H)  f32/bf16   xe : (TM, E) bf16/f32
#   W1h: (H, Hp)  bf16       W1e: (E, Hp) bf16      b1: (1, Hp) f32
#   W2 : (Hp, Tp) bf16       b2 : (1, Tp) f32       out: (TM, Tp) bf16
# Dropout is identity at inference (nn.Dropout in eval mode).
# ---------------------------------------------------------------------------
def detection_kernel(xh_ref, xe_ref, w1h_ref, w1e_ref, b1_ref, w2_ref, b2_ref,
                     o_ref):
    # Cast activations to bf16 on the VPU (hidden under DMA slack) so HBM only
    # carries each activation element once in its source dtype.
    xh = xh_ref[...].astype(jnp.bfloat16)
    xe = xe_ref[...].astype(jnp.bfloat16)
    # First linear with the concat folded in as a split contraction.
    h = jnp.dot(xh, w1h_ref[...], preferred_element_type=jnp.float32)
    h = h + jnp.dot(xe, w1e_ref[...], preferred_element_type=jnp.float32)
    h = h + b1_ref[...]
    h = jnp.maximum(h, 0.0)                       # relu in f32 (v5e-safe path)
    # TODO(synk): training-mode dropout (pltpu.prng_random_bits mask) not emitted; eval-mode identity only.
    o = jnp.dot(h.astype(w2_ref.dtype), w2_ref[...],
                preferred_element_type=jnp.float32) + b2_ref[...]
    o_ref[...] = o.astype(o_ref.dtype)            # bf16 writeback


def detection_head(x_h, x_e, w1, b1, w2, b2, *, block_m=2048):
    """x_h: (M, H), x_e: (M, E) -> padded bf16 logits (M, Tp)."""
    M, H = x_h.shape
    _, E = x_e.shape
    D, Hout = w1.shape                      # D = H + E
    T = w2.shape[1]
    assert D == H + E

    # Lane-dense padding of the intermediate / output widths (weights only;
    # zero padding is mathematically a no-op and is sliced off by the caller).
    Hp = _round_up(Hout, 128)
    Tp = _round_up(T, 128)
    w1p = jnp.zeros((D, Hp), jnp.float32).at[:, :Hout].set(w1.astype(jnp.float32))
    b1p = jnp.zeros((1, Hp), jnp.float32).at[0, :Hout].set(b1.astype(jnp.float32))
    w2p = jnp.zeros((Hp, Tp), jnp.float32).at[:Hout, :T].set(w2.astype(jnp.float32))
    b2p = jnp.zeros((1, Tp), jnp.float32).at[0, :T].set(b2.astype(jnp.float32))

    # Split W1 so the (M, H+E) concat never materializes in HBM; weights are
    # cast once (wrapper-side).  Activations pass through in their own dtype
    # and are cast inside the kernel.
    w1h = w1p[:H].astype(jnp.bfloat16)
    w1e = w1p[H:].astype(jnp.bfloat16)
    w2b = w2p.astype(jnp.bfloat16)

    tm = _tile_rows(M, block_m)
    grid = (pl.cdiv(M, tm),)

    xh_bytes = int(x_h.dtype.itemsize)
    xe_bytes = int(x_e.dtype.itemsize)
    weight_bytes = (H + E) * Hp * 2 + Hp * Tp * 2 + (Hp + Tp) * 4
    flops = 2 * M * (H * Hp + E * Hp + Hp * Tp)
    bytes_accessed = (M * H * xh_bytes + M * E * xe_bytes + weight_bytes
                      + M * Tp * 2)

    # Scoped VMEM: double-buffered row tiles + (double-buffered) resident
    # weights + f32 intermediates + headroom, capped under v7x's 64 MiB.
    vmem_need = (2 * tm * (H * xh_bytes + E * xe_bytes + Tp * 2)
                 + 2 * weight_bytes
                 + 3 * tm * max(Hp, Tp) * 4
                 + (8 << 20))
    vmem_limit = int(min(max(vmem_need, 16 << 20), 56 << 20))

    out_p = pl.pallas_call(
        detection_kernel,
        out_shape=jax.ShapeDtypeStruct((M, Tp), jnp.bfloat16),
        grid_spec=pl.GridSpec(
            grid=grid,
            in_specs=[
                pl.BlockSpec((tm, H), lambda i: (i, 0)),      # xh: tiled over M
                pl.BlockSpec((tm, E), lambda i: (i, 0)),      # xe: tiled over M
                pl.BlockSpec((H, Hp), lambda i: (0, 0)),      # W1h: resident
                pl.BlockSpec((E, Hp), lambda i: (0, 0)),      # W1e: resident
                pl.BlockSpec((1, Hp), lambda i: (0, 0)),      # b1:  resident
                pl.BlockSpec((Hp, Tp), lambda i: (0, 0)),     # W2:  resident
                pl.BlockSpec((1, Tp), lambda i: (0, 0)),      # b2:  resident
            ],
            out_specs=pl.BlockSpec((tm, Tp), lambda i: (i, 0)),
        ),
        compiler_params=pltpu.CompilerParams(
            dimension_semantics=("parallel",),    # M rows independent -> megacore
            vmem_limit_bytes=vmem_limit),
        cost_estimate=pl.CostEstimate(
            flops=flops, transcendentals=0, bytes_accessed=bytes_accessed),
    )(x_h, x_e, w1h, w1e, b1p, w2b, b2p)

    return out_p                                   # padded (M, Tp) bf16


# ---------------------------------------------------------------------------
# Full forward, mirroring DetectionModel.forward (mode='last')
# ---------------------------------------------------------------------------
def detection_forward(params, input_ids, hidden_states):
    # prepare_embeddings(mode='last')
    token_hidden_states = hidden_states[-1]                   # (B, S, H)
    B, S, H = token_hidden_states.shape

    # meta embedding lookup (glue: bf16 gather, no separate convert pass)
    flat_ids = input_ids.reshape(-1)                           # (B*S,)
    meta = jnp.take(params["meta_emb"], flat_ids, axis=0)      # (B*S, E) bf16

    logits_p = detection_head(
        token_hidden_states.reshape(B * S, H), meta,
        params["w1"], params["b1"], params["w2"], params["b2"])  # (M, Tp) bf16
    T = params["w2"].shape[1]
    # Slice reads bf16 (half the bytes); f32 upcast touches only T columns.
    return logits_p[:, :T].astype(jnp.float32).reshape(B, S, T)


# ---------------------------------------------------------------------------
# Deterministic parameter construction (shapes from __init__)
# ---------------------------------------------------------------------------
def init_params(key, vocab_size, hidden_dim, meta_embedding_dim, num_token_types):
    k_emb, k_w1, k_b1, k_w2, k_b2 = jax.random.split(key, 5)
    D = hidden_dim + meta_embedding_dim
    # nn.Linear stores (out, in); we keep the (in, out) transpose for matmul.
    params = {
        # bf16 table so the gather emits bf16 directly.
        "meta_emb": (jax.random.normal(k_emb, (vocab_size, meta_embedding_dim),
                                       jnp.float32) * 0.02).astype(jnp.bfloat16),
        "w1": jax.random.normal(k_w1, (D, hidden_dim), jnp.float32) / jnp.sqrt(D),
        "b1": jax.random.normal(k_b1, (hidden_dim,), jnp.float32) * 0.01,
        "w2": jax.random.normal(k_w2, (hidden_dim, num_token_types),
                                jnp.float32) / jnp.sqrt(hidden_dim),
        "b2": jax.random.normal(k_b2, (num_token_types,), jnp.float32) * 0.01,
    }
    return params


if __name__ == "__main__":
    # Small config: B=2, S=8, hidden=32, meta_emb=16, vocab=50, 5 token types,
    # 4 transformer "layers" of hidden states.
    B, S, H, E, VOCAB, NUM_TYPES, NUM_LAYERS = 2, 8, 32, 16, 50, 5, 4

    key = jax.random.PRNGKey(0)
    k_params, k_ids, k_hs = jax.random.split(key, 3)

    params = init_params(k_params, VOCAB, H, E, NUM_TYPES)
    input_ids = jax.random.randint(k_ids, (B, S), 0, VOCAB, dtype=jnp.int32)
    hidden_states = jax.random.normal(k_hs, (NUM_LAYERS, B, S, H), jnp.float32)

    out = detection_forward(params, input_ids, hidden_states)   # (B, S, NUM_TYPES)
    jax.block_until_ready(out)

    # Pure-JAX reference with the same bf16 boundary casts / f32 accumulation /
    # bf16 output rounding (tight), plus a loose check against full-f32 math.
    th = hidden_states[-1].reshape(B * S, H)
    meta = jnp.take(params["meta_emb"], input_ids.reshape(-1), axis=0)   # bf16
    xh_b = th.astype(jnp.bfloat16)
    xe_b = meta.astype(jnp.bfloat16)
    w1h_b = params["w1"][:H].astype(jnp.bfloat16)
    w1e_b = params["w1"][H:].astype(jnp.bfloat16)
    w2_b = params["w2"].astype(jnp.bfloat16)
    h_ref = jnp.maximum(
        jnp.dot(xh_b, w1h_b, preferred_element_type=jnp.float32)
        + jnp.dot(xe_b, w1e_b, preferred_element_type=jnp.float32)
        + params["b1"], 0.0)
    ref = (jnp.dot(h_ref.astype(jnp.bfloat16), w2_b,
                   preferred_element_type=jnp.float32) + params["b2"])
    ref = ref.astype(jnp.bfloat16).astype(jnp.float32).reshape(B, S, NUM_TYPES)

    x_f32 = jnp.concatenate([th, meta.astype(jnp.float32)], axis=1)
    ref_f32 = (jnp.maximum(x_f32 @ params["w1"] + params["b1"], 0.0)
               @ params["w2"] + params["b2"]).reshape(B, S, NUM_TYPES)

    assert out.shape == (B, S, NUM_TYPES)
    assert jnp.allclose(out, ref, atol=1e-2, rtol=1e-2)
    assert jnp.allclose(out, ref_f32, atol=8e-2, rtol=8e-2)

    print("KERNEL_OK")
</pallas_src>

<mosaic_0001>
module attributes {stable_mosaic.version = 11 : i64} {
  func.func @detection_kernel(%arg0: i32, %arg1: memref<16x32xf32, #tpu.memory_space<vmem>>, %arg2: memref<16x16xbf16, #tpu.memory_space<vmem>>, %arg3: memref<32x128xbf16, #tpu.memory_space<vmem>>, %arg4: memref<16x128xbf16, #tpu.memory_space<vmem>>, %arg5: memref<1x128xf32, #tpu.memory_space<vmem>>, %arg6: memref<128x128xbf16, #tpu.memory_space<vmem>>, %arg7: memref<1x128xf32, #tpu.memory_space<vmem>>, %arg8: memref<16x128xbf16, #tpu.memory_space<vmem>>) attributes {dimension_semantics = [#tpu.dimension_semantics<parallel>], iteration_bounds = array<i64: 1>, scalar_prefetch = 0 : i64, scratch_operands = 0 : i64, tpu.core_type = #tpu.core_type<tc>, window_params = [{transform_indices = @transform_0, window_bounds = array<i64: 16, 32>}, {transform_indices = @transform_1, window_bounds = array<i64: 16, 16>}, {pipeline_mode = #tpu.pipeline_mode<synchronous>, transform_indices = @transform_2, window_bounds = array<i64: 32, 128>}, {pipeline_mode = #tpu.pipeline_mode<synchronous>, transform_indices = @transform_3, window_bounds = array<i64: 16, 128>}, {pipeline_mode = #tpu.pipeline_mode<synchronous>, transform_indices = @transform_4, window_bounds = array<i64: 1, 128>}, {pipeline_mode = #tpu.pipeline_mode<synchronous>, transform_indices = @transform_5, window_bounds = array<i64: 128, 128>}, {pipeline_mode = #tpu.pipeline_mode<synchronous>, transform_indices = @transform_6, window_bounds = array<i64: 1, 128>}, {transform_indices = @transform_7, window_bounds = array<i64: 16, 128>}]} {
    %c0 = arith.constant 0 : index
    %c0_0 = arith.constant 0 : index
    %0 = vector.load %arg1[%c0, %c0_0] : memref<16x32xf32, #tpu.memory_space<vmem>>, vector<16x32xf32>
    %1 = arith.truncf %0 : vector<16x32xf32> to vector<16x32xbf16>
    %c0_1 = arith.constant 0 : index
    %c0_2 = arith.constant 0 : index
    %2 = vector.load %arg2[%c0_1, %c0_2] : memref<16x16xbf16, #tpu.memory_space<vmem>>, vector<16x16xbf16>
    %c0_3 = arith.constant 0 : index
    %c0_4 = arith.constant 0 : index
    %3 = vector.load %arg3[%c0_3, %c0_4] : memref<32x128xbf16, #tpu.memory_space<vmem>>, vector<32x128xbf16>
    %cst = arith.constant dense<0.000000e+00> : vector<16x128xf32>
    %4 = tpu.matmul %1, %3, %cst {dimension_numbers = #tpu.dot_dimension_numbers<[1], [0], [0], [1], [0, 0, 1, 1], [], []>} : vector<16x32xbf16>, vector<32x128xbf16>, vector<16x128xf32> -> vector<16x128xf32>
    %c0_5 = arith.constant 0 : index
    %c0_6 = arith.constant 0 : index
    %5 = vector.load %arg4[%c0_5, %c0_6] : memref<16x128xbf16, #tpu.memory_space<vmem>>, vector<16x128xbf16>
    %cst_7 = arith.constant dense<0.000000e+00> : vector<16x128xf32>
    %6 = tpu.matmul %2, %5, %cst_7 {dimension_numbers = #tpu.dot_dimension_numbers<[1], [0], [0], [1], [0, 0, 1, 1], [], []>} : vector<16x16xbf16>, vector<16x128xbf16>, vector<16x128xf32> -> vector<16x128xf32>
    %7 = arith.addf %4, %6 : vector<16x128xf32>
    %c0_8 = arith.constant 0 : index
    %c0_9 = arith.constant 0 : index
    %8 = vector.load %arg5[%c0_8, %c0_9] : memref<1x128xf32, #tpu.memory_space<vmem>>, vector<1x128xf32>
    %9 = vector.broadcast %8 : vector<1x128xf32> to vector<16x128xf32>
    %10 = arith.addf %7, %9 : vector<16x128xf32>
    %cst_10 = arith.constant 0.000000e+00 : f32
    %11 = vector.broadcast %cst_10 : f32 to vector<16x128xf32>
    %12 = arith.maximumf %10, %11 : vector<16x128xf32>
    %13 = arith.truncf %12 : vector<16x128xf32> to vector<16x128xbf16>
    %c0_11 = arith.constant 0 : index
    %c0_12 = arith.constant 0 : index
    %14 = vector.load %arg6[%c0_11, %c0_12] : memref<128x128xbf16, #tpu.memory_space<vmem>>, vector<128x128xbf16>
    %cst_13 = arith.constant dense<0.000000e+00> : vector<16x128xf32>
    %15 = tpu.matmul %13, %14, %cst_13 {dimension_numbers = #tpu.dot_dimension_numbers<[1], [0], [0], [1], [0, 0, 1, 1], [], []>} : vector<16x128xbf16>, vector<128x128xbf16>, vector<16x128xf32> -> vector<16x128xf32>
    %c0_14 = arith.constant 0 : index
    %c0_15 = arith.constant 0 : index
    %16 = vector.load %arg7[%c0_14, %c0_15] : memref<1x128xf32, #tpu.memory_space<vmem>>, vector<1x128xf32>
    %17 = vector.broadcast %16 : vector<1x128xf32> to vector<16x128xf32>
    %18 = arith.addf %15, %17 : vector<16x128xf32>
    %19 = arith.truncf %18 : vector<16x128xf32> to vector<16x128xbf16>
    %c0_16 = arith.constant 0 : index
    %c0_17 = arith.constant 0 : index
    %20 = vector.load %arg8[%c0_16, %c0_17] : memref<16x128xbf16, #tpu.memory_space<vmem>>, vector<16x128xbf16>
    tpu.vector_store %arg8[%c0_16, %c0_17], %19 {strides = array<i32>} : memref<16x128xbf16, #tpu.memory_space<vmem>>, vector<16x128xbf16>,
    return
  }
  func.func @transform_0(%arg0: i32) -> (i32, i32) {
    %c0_i32 = arith.constant 0 : i32
    %c0_i32_0 = arith.constant 0 : i32
    return %arg0, %c0_i32 : i32, i32
  }
  func.func @transform_1(%arg0: i32) -> (i32, i32) {
    %c0_i32 = arith.constant 0 : i32
    %c0_i32_0 = arith.constant 0 : i32
    return %arg0, %c0_i32 : i32, i32
  }
  func.func @transform_2(%arg0: i32) -> (i32, i32) {
    %c0_i32 = arith.constant 0 : i32
    %c0_i32_0 = arith.constant 0 : i32
    %c0_i32_1 = arith.constant 0 : i32
    return %c0_i32, %c0_i32_0 : i32, i32
  }
  func.func @transform_3(%arg0: i32) -> (i32, i32) {
    %c0_i32 = arith.constant 0 : i32
    %c0_i32_0 = arith.constant 0 : i32
    %c0_i32_1 = arith.constant 0 : i32
    return %c0_i32, %c0_i32_0 : i32, i32
  }
  func.func @transform_4(%arg0: i32) -> (i32, i32) {
    %c0_i32 = arith.constant 0 : i32
    %c0_i32_0 = arith.constant 0 : i32
    %c0_i32_1 = arith.constant 0 : i32
    return %c0_i32, %c0_i32_0 : i32, i32
  }
  func.func @transform_5(%arg0: i32) -> (i32, i32) {
    %c0_i32 = arith.constant 0 : i32
    %c0_i32_0 = arith.constant 0 : i32
    %c0_i32_1 = arith.constant 0 : i32
    return %c0_i32, %c0_i32_0 : i32, i32
  }
  func.func @transform_6(%arg0: i32) -> (i32, i32) {
    %c0_i32 = arith.constant 0 : i32
    %c0_i32_0 = arith.constant 0 : i32
    %c0_i32_1 = arith.constant 0 : i32
    return %c0_i32, %c0_i32_0 : i32, i32
  }
  func.func @transform_7(%arg0: i32) -> (i32, i32) {
    %c0_i32 = arith.constant 0 : i32
    %c0_i32_0 = arith.constant 0 : i32
    return %arg0, %c0_i32 : i32, i32
  }
}

</mosaic_0001>

<llo_original>
// kernel: tpu_custom_call.1
$region0: #{tpu_custom_call.1}
  #allocation0 [shape = 'u32[]', space=smem, size = 0x4, offset = 0x4, fixed_abs, tag = 'smem constant byte address 0x4 - core index']
  #allocation1 [shape = 'u32[144,128]{1,0:T(1,128)}', space=vmem, size = 0x12000, scoped, tag = 'internal scratch']
  %s0 = inlined_call_operand.hbm [shape: f32[16,32], index: 0, kind: input, shape index: {}]
  %s1 = inlined_call_operand.hbm [shape: bf16[16,16], index: 1, kind: input, shape index: {}]
  %s2 = inlined_call_operand.hbm [shape: bf16[32,128], index: 2, kind: input, shape index: {}]
  %s3 = inlined_call_operand.vmem [shape: bf16[16,128], index: 3, kind: input, shape index: {}]
  %s4 = inlined_call_operand.vmem [shape: f32[1,128], index: 4, kind: input, shape index: {}]
  %s5 = inlined_call_operand.hbm [shape: bf16[128,128], index: 5, kind: input, shape index: {}]
  %s6 = inlined_call_operand.vmem [shape: f32[1,128], index: 6, kind: input, shape index: {}]
  %s7 = inlined_call_operand.hbm [shape: bf16[16,128], index: 7, kind: output, shape index: {}]
  %s8 = sld [smem:[#allocation0]]
  $region54: #{tpu_custom_call.1} parent=0
    _
  %s10 = ssub.s32 1, %s8
  %s11 = scalar_select 0, %s10, %s8
  $region1: #{tpu_custom_call.1} parent=0
    #allocation2 [shape = 'u8[8192]{0}', space=vmem, size = 0x2000, scoped, tag = 'input window, operand 0, single buffered']
    #allocation3 [shape = 's32[1]{0}', space=sflag, size = 0x4, scoped, tag = 'scoped memory for tpu_custom_call.1']
    #allocation4 [shape = 's32[1]{0}', space=sflag, size = 0x4, scoped, tag = 'scoped memory for tpu_custom_call.1']
    #allocation5 [shape = 'u8[4096]{0}', space=vmem, size = 0x1000, scoped, tag = 'input window, operand 1, single buffered']
    #allocation6 [shape = 's32[1]{0}', space=sflag, size = 0x4, scoped, tag = 'scoped memory for tpu_custom_call.1']
    #allocation7 [shape = 'u8[8192]{0}', space=vmem, size = 0x2000, scoped, tag = 'input window, operand 2, single buffered']
    #allocation8 [shape = 'u8[32768]{0}', space=vmem, size = 0x8000, scoped, tag = 'input window, operand 5, single buffered']
    #allocation9 [shape = 's32[1]{0}', space=sflag, size = 0x4, scoped, tag = 'scoped memory for tpu_custom_call.1']
    #allocation10 [shape = 'u8[4096]{0}', space=vmem, size = 0x1000, scoped, tag = 'output window, operand 0, single buffered']
    %12 = vsyncpa [#allocation3], 0
    %13 = vsyncpa [#allocation6], 0
    %14 = vsyncpa [#allocation9], 0
    %15 = vsyncpa [#allocation4], 0
    // Predicated region
    $region2: #{tpu_custom_call.1} parent=1 // pred_check
      _
    $region3: #{tpu_custom_call.1} parent=1 // pred_check_branch
      %17 = sbr.rel (0) target = $region5
    $region4: #{tpu_custom_call.1} parent=1 // pred_region
      %s19 = ssub.s32 256, 256
      %20 = vsyncadd [#allocation3], %s19
      %s21 = sshll.u32 [#allocation2], 4
      %s22 = int_to_ptr.vmem [resolvable:$true] %s21
      %27 = dma.hbm_to_vmem [thread:$0]  %s0, 256, %s22, [#allocation3], 128, 128, 8
    $region5: #{tpu_custom_call.1} parent=1 // pred_fallthru
      _
    // Predicated region
    $region6: #{tpu_custom_call.1} parent=1 // pred_check
      _
    $region7: #{tpu_custom_call.1} parent=1 // pred_check_branch
      %29 = sbr.rel (0) target = $region9
    $region8: #{tpu_custom_call.1} parent=1 // pred_region
      %s31 = ssub.s32 128, 128
      %32 = vsyncadd [#allocation6], %s31
      %s33 = sshll.u32 [#allocation5], 4
      %s34 = int_to_ptr.vmem [resolvable:$true] %s33
      %39 = dma.hbm_to_vmem [thread:$0]  %s1, 128, %s34, [#allocation6], 64, 64, 4
    $region9: #{tpu_custom_call.1} parent=1 // pred_fallthru
      _
    // Predicated region
    $region10: #{tpu_custom_call.1} parent=1 // pred_check
      _
    $region11: #{tpu_custom_call.1} parent=1 // pred_check_branch
      %41 = sbr.rel (0) target = $region13
    $region12: #{tpu_custom_call.1} parent=1 // pred_region
      %s43 = ssub.s32 256, 256
      %44 = vsyncadd [#allocation6], %s43
      %s45 = sshll.u32 [#allocation7], 4
      %s46 = int_to_ptr.vmem [resolvable:$true] %s45
      %51 = dma.hbm_to_vmem [thread:$0]  %s2, 256, %s46, [#allocation6], 64, 64, 4
    $region13: #{tpu_custom_call.1} parent=1 // pred_fallthru
      _
    // Predicated region
    $region14: #{tpu_custom_call.1} parent=1 // pred_check
      _
    $region15: #{tpu_custom_call.1} parent=1 // pred_check_branch
      %53 = sbr.rel (0) target = $region17
    $region16: #{tpu_custom_call.1} parent=1 // pred_region
      _
    $region17: #{tpu_custom_call.1} parent=1 // pred_fallthru
      _
    // Predicated region
    $region18: #{tpu_custom_call.1} parent=1 // pred_check
      _
    $region19: #{tpu_custom_call.1} parent=1 // pred_check_branch
      %55 = sbr.rel (0) target = $region21
    $region20: #{tpu_custom_call.1} parent=1 // pred_region
      _
    $region21: #{tpu_custom_call.1} parent=1 // pred_fallthru
      _
    // Predicated region
    $region22: #{tpu_custom_call.1} parent=1 // pred_check
      _
    $region23: #{tpu_custom_call.1} parent=1 // pred_check_branch
      %57 = sbr.rel (0) target = $region25
    $region24: #{tpu_custom_call.1} parent=1 // pred_region
      %s59 = ssub.s32 1024, 1024
      %60 = vsyncadd [#allocation9], %s59
      %s61 = sshll.u32 [#allocation8], 4
      %s62 = int_to_ptr.vmem [resolvable:$true] %s61
      %67 = dma.hbm_to_vmem [thread:$0]  %s5, 1024, %s62, [#allocation9], 64, 64, 4
    $region25: #{tpu_custom_call.1} parent=1 // pred_fallthru
      _
    // Predicated region
    $region26: #{tpu_custom_call.1} parent=1 // pred_check
      _
    $region27: #{tpu_custom_call.1} parent=1 // pred_check_branch
      %69 = sbr.rel (0) target = $region29
    $region28: #{tpu_custom_call.1} parent=1 // pred_region
      _
    $region29: #{tpu_custom_call.1} parent=1 // pred_fallthru
      _
    // Predicated region
    $region30: #{tpu_custom_call.1} parent=1 // pred_check
      _
    $region31: #{tpu_custom_call.1} parent=1 // pred_check_branch
      %71 = sbr.rel (0) target = $region33
    $region32: #{tpu_custom_call.1} parent=1 // pred_region
      %72 = dma.done [#allocation3], 256
    $region33: #{tpu_custom_call.1} parent=1 // pred_fallthru
      _
    // Predicated region
    $region34: #{tpu_custom_call.1} parent=1 // pred_check
      _
    $region35: #{tpu_custom_call.1} parent=1 // pred_check_branch
      %74 = sbr.rel (0) target = $region37
    $region36: #{tpu_custom_call.1} parent=1 // pred_region
      %75 = dma.done [#allocation6], 128
    $region37: #{tpu_custom_call.1} parent=1 // pred_fallthru
      _
    // Predicated region
    $region38: #{tpu_custom_call.1} parent=1 // pred_check
      _
    $region39: #{tpu_custom_call.1} parent=1 // pred_check_branch
      %77 = sbr.rel (0) target = $region41
    $region40: #{tpu_custom_call.1} parent=1 // pred_region
      %78 = dma.done [#allocation6], 256
    $region41: #{tpu_custom_call.1} parent=1 // pred_fallthru
      _
    // Predicated region
    $region42: #{tpu_custom_call.1} parent=1 // pred_check
      _
    $region43: #{tpu_custom_call.1} parent=1 // pred_check_branch
      %80 = sbr.rel (0) target = $region45
    $region44: #{tpu_custom_call.1} parent=1 // pred_region
      %81 = dma.done [#allocation9], 1024
    $region45: #{tpu_custom_call.1} parent=1 // pred_fallthru
      _
    %v83 = vld [vmem:[#allocation2] sm:$0xff]
    %v84 = vld [vmem:[#allocation2 + $0x8] sm:$0xff]
    %v85 = vpack.c.bf16 %v84, %v83
    %v86 = vld [vmem:[#allocation5] sm:$0xf]
    %v87 = vld [vmem:[#allocation5 + $0x4] sm:$0xf]
    %v88 = vld [vmem:[#allocation7] sm:$0xf]
    %v89 = vld [vmem:[#allocation7 + $0x4] sm:$0xf]
    %v90 = vld [vmem:[#allocation7 + $0x8] sm:$0xf]
    %v91 = vld [vmem:[#allocation7 + $0xc] sm:$0xf]
    %v92 = vld [vmem:[%s3] sm:$0xf]
    %v93 = vld [vmem:[%s3 + $0x4] sm:$0xf]
    %v96 = vunpack.c.l.b16 %v86
    %v97 = vunpack.c.l.b16 %v87
    %v98 = vpack.c.b16 %v97, %v96
    %v101 = vunpack.c.l.b16 %v92
    %v102 = vunpack.c.l.b16 %v93
    %v103 = vpack.c.b16 %v102, %v101
    %vm105 = vcmask 130048
    %v107 = vsel %vm105, %v98, 0
    %109 = vmatprep.subr.bf16.mxu0 0
    %110 = vmatpush1.bf16.msra.mxu0 %v103
    %111 = vmatprep.subr.bf16.mxu0 0
    %112 = vmatpush1.bf16.msra.mxu0 0
    %113 = vmatprep.subr.bf16.mxu0 0
    %114 = vmatpush1.bf16.msra.mxu0 0
    %115 = vmatprep.subr.bf16.mxu0 0
    %116 = vmatpush1.bf16.msra.mxu0 0
    %117 = vmatprep.subr.bf16.mxu0 0
    %118 = vmatpush1.bf16.msra.mxu0 0
    %119 = vmatprep.subr.bf16.mxu0 0
    %120 = vmatpush1.bf16.msra.mxu0 0
    %121 = vmatprep.subr.bf16.mxu0 0
    %122 = vmatpush1.bf16.msra.mxu0 0
    %123 = vmatprep.subr.bf16.mxu0 0
    %124 = vmatpush1.bf16.msra.mxu0 0
    %125 = vmatprep.subr.bf16.mxu0 0
    %126 = vmatpush1.bf16.msra.mxu0 0
    %127 = vmatprep.subr.bf16.mxu0 0
    %128 = vmatpush1.bf16.msra.mxu0 0
    %129 = vmatprep.subr.bf16.mxu0 0
    %130 = vmatpush1.bf16.msra.mxu0 0
    %131 = vmatprep.subr.bf16.mxu0 0
    %132 = vmatpush1.bf16.msra.mxu0 0
    %133 = vmatprep.subr.bf16.mxu0 0
    %134 = vmatpush1.bf16.msra.mxu0 0
    %135 = vmatprep.subr.bf16.mxu0 0
    %136 = vmatpush1.bf16.msra.mxu0 0
    %137 = vmatprep.subr.bf16.mxu0 0
    %138 = vmatpush1.bf16.msra.mxu0 0
    %139 = vmatprep.subr.bf16.mxu0 0
    %140 = vmatpush1.bf16.msra.mxu0 0
    %141 = vmatprep.mubr.bf16.mxu0 0
    %142 = vmatmul.mubr.bf16.gmra.mrb[0].mxu0 %v107
    %v143 = vpop.f32.mrb[0].mxu0
    %v144 = vadd.f32 0.0, %v143
    %v145 = vpop.f32.mrb[0].mxu0
    %v146 = vpop.f32.mrb[0].mxu0
    %v147 = vadd.f32 0.0, %v146
    %v148 = vpop.f32.mrb[0].mxu0
    %149 = vdwg.mxu0
    %v154 = vunpack.c.l.b16 %v88
    %v155 = vunpack.c.l.b16 %v89
    %v156 = vunpack.c.l.b16 %v90
    %v157 = vunpack.c.l.b16 %v91
    %v158 = vpack.c.b16 %v155, %v154
    %v159 = vpack.c.b16 %v157, %v156
    %vm162 = vcmask 261120
    %v164 = vsel %vm162, %v85, 0
    %166 = vmatprep.subr.bf16.mxu0 0
    %167 = vmatpush1.bf16.msra.mxu0 %v158
    %168 = vmatprep.subr.bf16.mxu0 0
    %169 = vmatpush1.bf16.msra.mxu0 %v159
    %170 = vmatprep.subr.bf16.mxu0 0
    %171 = vmatpush1.bf16.msra.mxu0 0
    %172 = vmatprep.subr.bf16.mxu0 0
    %173 = vmatpush1.bf16.msra.mxu0 0
    %174 = vmatprep.subr.bf16.mxu0 0
    %175 = vmatpush1.bf16.msra.mxu0 0
    %176 = vmatprep.subr.bf16.mxu0 0
    %177 = vmatpush1.bf16.msra.mxu0 0
    %178 = vmatprep.subr.bf16.mxu0 0
    %179 = vmatpush1.bf16.msra.mxu0 0
    %180 = vmatprep.subr.bf16.mxu0 0
    %181 = vmatpush1.bf16.msra.mxu0 0
    %182 = vmatprep.subr.bf16.mxu0 0
    %183 = vmatpush1.bf16.msra.mxu0 0
    %184 = vmatprep.subr.bf16.mxu0 0
    %185 = vmatpush1.bf16.msra.mxu0 0
    %186 = vmatprep.subr.bf16.mxu0 0
    %187 = vmatpush1.bf16.msra.mxu0 0
    %188 = vmatprep.subr.bf16.mxu0 0
    %189 = vmatpush1.bf16.msra.mxu0 0
    %190 = vmatprep.subr.bf16.mxu0 0
    %191 = vmatpush1.bf16.msra.mxu0 0
    %192 = vmatprep.subr.bf16.mxu0 0
    %193 = vmatpush1.bf16.msra.mxu0 0
    %194 = vmatprep.subr.bf16.mxu0 0
    %195 = vmatpush1.bf16.msra.mxu0 0
    %196 = vmatprep.subr.bf16.mxu0 0
    %197 = vmatpush1.bf16.msra.mxu0 0
    %198 = vmatprep.mubr.bf16.mxu0 0
    %199 = vmatmul.mubr.bf16.gmra.mrb[0].mxu0 %v164
    %v200 = vpop.f32.mrb[0].mxu0
    %v201 = vadd.f32 %v144, %v200
    %v202 = vpop.f32.mrb[0].mxu0
    %v203 = vpop.f32.mrb[0].mxu0
    %v204 = vadd.f32 %v147, %v203
    %v205 = vpop.f32.mrb[0].mxu0
    %206 = vdwg.mxu0
    %v207 = vld [vmem:[%s4] sm:$0x1]
    %v209 = vlaneseq
    %v210 = vshrl.u32 %v209, 7
    %v211 = vsub.s32 0, %v210
    %v212 = vrot.slane %v207, %v211
    %v214 = vadd.f32 %v201, %v212
    %v215 = vadd.f32 %v204, %v212
    %v216 = vmax.f32 %v214, 0.0
    %v217 = vmax.f32 %v215, 0.0
    %v218 = vpack.c.bf16 %v217, %v216
    %v219 = vld [vmem:[#allocation8] sm:$0xf]
    %v220 = vld [vmem:[#allocation8 + $0x4] sm:$0xf]
    %v221 = vld [vmem:[#allocation8 + $0x8] sm:$0xf]
    %v222 = vld [vmem:[#allocation8 + $0xc] sm:$0xf]
    %v223 = vld [vmem:[#allocation8 + $0x10] sm:$0xf]
    %v224 = vld [vmem:[#allocation8 + $0x14] sm:$0xf]
    %v225 = vld [vmem:[#allocation8 + $0x18] sm:$0xf]
    %v226 = vld [vmem:[#allocation8 + $0x1c] sm:$0xf]
    %v227 = vld [vmem:[#allocation8 + $0x20] sm:$0xf]
    %v228 = vld [vmem:[#allocation8 + $0x24] sm:$0xf]
    %v229 = vld [vmem:[#allocation8 + $0x28] sm:$0xf]
    %v230 = vld [vmem:[#allocation8 + $0x2c] sm:$0xf]
    %v231 = vld [vmem:[#allocation8 + $0x30] sm:$0xf]
    %v232 = vld [vmem:[#allocation8 + $0x34] sm:$0xf]
    %v233 = vld [vmem:[#allocation8 + $0x38] sm:$0xf]
    %v234 = vld [vmem:[#allocation8 + $0x3c] sm:$0xf]
    %v235 = vld [vmem:[%s6] sm:$0x1]
    %v237 = vlaneseq
    %v238 = vshrl.u32 %v237, 7
    %v239 = vsub.s32 0, %v238
    %v240 = vrot.slane %v235, %v239
    %v258 = vunpack.c.l.b16 %v219
    %v259 = vunpack.c.l.b16 %v220
    %v260 = vunpack.c.l.b16 %v221
    %v261 = vunpack.c.l.b16 %v222
    %v262 = vunpack.c.l.b16 %v223
    %v263 = vunpack.c.l.b16 %v224
    %v264 = vunpack.c.l.b16 %v225
    %v265 = vunpack.c.l.b16 %v226
    %v266 = vunpack.c.l.b16 %v227
    %v267 = vunpack.c.l.b16 %v228
    %v268 = vunpack.c.l.b16 %v229
    %v269 = vunpack.c.l.b16 %v230
    %v270 = vunpack.c.l.b16 %v231
    %v271 = vunpack.c.l.b16 %v232
    %v272 = vunpack.c.l.b16 %v233
    %v273 = vunpack.c.l.b16 %v234
    %v274 = vpack.c.b16 %v259, %v258
    %v275 = vpack.c.b16 %v261, %v260
    %v276 = vpack.c.b16 %v263, %v262
    %v277 = vpack.c.b16 %v265, %v264
    %v278 = vpack.c.b16 %v267, %v266
    %v279 = vpack.c.b16 %v269, %v268
    %v280 = vpack.c.b16 %v271, %v270
    %v281 = vpack.c.b16 %v273, %v272
    %290 = vmatprep.subr.bf16.mxu0 0
    %291 = vmatpush1.bf16.msra.mxu0 %v274
    %292 = vmatprep.subr.bf16.mxu0 0
    %293 = vmatpush1.bf16.msra.mxu0 %v275
    %294 = vmatprep.subr.bf16.mxu0 0
    %295 = vmatpush1.bf16.msra.mxu0 %v276
    %296 = vmatprep.subr.bf16.mxu0 0
    %297 = vmatpush1.bf16.msra.mxu0 %v277
    %298 = vmatprep.subr.bf16.mxu0 0
    %299 = vmatpush1.bf16.msra.mxu0 %v278
    %300 = vmatprep.subr.bf16.mxu0 0
    %301 = vmatpush1.bf16.msra.mxu0 %v279
    %302 = vmatprep.subr.bf16.mxu0 0
    %303 = vmatpush1.bf16.msra.mxu0 %v280
    %304 = vmatprep.subr.bf16.mxu0 0
    %305 = vmatpush1.bf16.msra.mxu0 %v281
    %306 = vmatprep.subr.bf16.mxu0 0
    %307 = vmatpush1.bf16.msra.mxu0 0
    %308 = vmatprep.subr.bf16.mxu0 0
    %309 = vmatpush1.bf16.msra.mxu0 0
    %310 = vmatprep.subr.bf16.mxu0 0
    %311 = vmatpush1.bf16.msra.mxu0 0
    %312 = vmatprep.subr.bf16.mxu0 0
    %313 = vmatpush1.bf16.msra.mxu0 0
    %314 = vmatprep.subr.bf16.mxu0 0
    %315 = vmatpush1.bf16.msra.mxu0 0
    %316 = vmatprep.subr.bf16.mxu0 0
    %317 = vmatpush1.bf16.msra.mxu0 0
    %318 = vmatprep.subr.bf16.mxu0 0
    %319 = vmatpush1.bf16.msra.mxu0 0
    %320 = vmatprep.subr.bf16.mxu0 0
    %321 = vmatpush1.bf16.msra.mxu0 0
    %322 = vmatprep.mubr.bf16.mxu0 0
    %323 = vmatmul.mubr.bf16.gmra.mrb[0].mxu0 %v218
    %v324 = vpop.f32.mrb[0].mxu0
    %v325 = vadd.f32 %v240, %v324
    %v326 = vpop.f32.mrb[0].mxu0
    %v327 = vpop.f32.mrb[0].mxu0
    %v328 = vadd.f32 %v240, %v327
    %v329 = vpop.f32.mrb[0].mxu0
    %330 = vdwg.mxu0
    %v331 = vpack.c.bf16 %v328, %v325
    %v333 = vunpack.c.l.b16 %v331
    %v334 = vunpack.c.h.b16 %v331
    %v335 = vpack.c.b16 %v333, %v333
    %v336 = vpack.c.b16 %v334, %v334
    %339 = vst [vmem:[#allocation10] sm:$0xf] %v335
    %340 = vst [vmem:[#allocation10 + $0x4] sm:$0xf] %v336
    // Predicated region
    $region46: #{tpu_custom_call.1} parent=1 // pred_check
      _
    $region47: #{tpu_custom_call.1} parent=1 // pred_check_branch
      %342 = sbr.rel (0) target = $region49
    $region48: #{tpu_custom_call.1} parent=1 // pred_region
      %s344 = ssub.s32 128, 128
      %345 = vsyncadd [#allocation4], %s344
      %s346 = sshll.u32 [#allocation10], 4
      %s347 = int_to_ptr.vmem [resolvable:$true] %s346
      %352 = dma.vmem_to_hbm [thread:$0]  %s347, 128, %s7, [#allocation4], 64, 64, 4
    $region49: #{tpu_custom_call.1} parent=1 // pred_fallthru
      _
    // Predicated region
    $region50: #{tpu_custom_call.1} parent=1 // pred_check
      _
    $region51: #{tpu_custom_call.1} parent=1 // pred_check_branch
      %354 = sbr.rel (0) target = $region53
    $region52: #{tpu_custom_call.1} parent=1 // pred_region
      %355 = dma.done [#allocation4], 128
    $region53: #{tpu_custom_call.1} parent=1 // pred_fallthru
      _
    %356 = vsyncpa [#allocation3], 1
    %357 = vsyncpa [#allocation6], 1
    %358 = vsyncpa [#allocation9], 1
    %359 = vsyncpa [#allocation4], 1

</llo_original>
